<compile_context>
chip_gen: v7x
topology: tpu7x:2x2x1
jax: 0.10.0
libtpu: 0.0.40
codegen_flags: <defaults>
</compile_context>

<pallas_src>
import jax
import jax.numpy as jnp
from jax.experimental import pallas as pl
from jax.experimental.pallas import tpu as pltpu

TILE_B = 512  # batch (lane-axis) tile per grid step


def _affine_vpu(h, wb_ref, relu):
    """out = W @ h + b computed as unrolled VPU broadcast multiply-adds.

    h:      (K, N) f32 activations, batch N on the lane axis.
    wb_ref: (M, K+1) VMEM ref; columns 0..K-1 are W, column K is the bias.
    """
    K, N = h.shape
    M = wb_ref.shape[0]
    acc = jnp.broadcast_to(wb_ref[:, K:K + 1], (M, N))          # bias
    for k in range(K):                                          # static unroll, K in {2, 4}
        acc = acc + wb_ref[:, k:k + 1] * h[k:k + 1, :]          # (M,1)*(1,N) -> (M,N)
    if relu:
        acc = jnp.maximum(acc, 0.0)                             # VPU, not EUP
    return acc


def _mlp_kernel(xt_ref, wb1_ref, wb2_ref, wb3_ref, wb4_ref, o_ref):
    h = _affine_vpu(xt_ref[...], wb1_ref, relu=True)
    h = _affine_vpu(h, wb2_ref, relu=True)
    h = _affine_vpu(h, wb3_ref, relu=True)
    out = _affine_vpu(h, wb4_ref, relu=False)
    o_ref[...] = out.astype(o_ref.dtype)


def prepare_params(params):
    """Pack each layer's PyTorch-convention (out,in) weight and (out,) bias into a
    single (out, in+1) f32 slab. Call ONCE at parameter-load time (outside the
    per-step path) so no transposes/concats are re-emitted every forward call."""
    def pack(w, b):
        return jnp.concatenate([w, b[:, None]], axis=1).astype(jnp.float32)
    return (pack(params["w1"], params["b1"]),
            pack(params["w2"], params["b2"]),
            pack(params["w3"], params["b3"]),
            pack(params["w4"], params["b4"]))


def l3_relu_lr(x, packed):
    """Fused forward pass of L3ReLULR.

    x:      (B, in_features) float32
    packed: output of prepare_params(params)
    """
    wb1, wb2, wb3, wb4 = packed
    B, in_features = x.shape
    out_features = wb4.shape[0]

    xt = x.T                                   # (in, B): batch on the lane axis
    tile_b = B if B <= TILE_B else TILE_B      # full-dim block if batch is small
    grid = (pl.cdiv(B, tile_b),)

    resident = lambda a: pl.BlockSpec(a.shape, lambda i: (0, 0))
    param_bytes = 4 * (wb1.size + wb2.size + wb3.size + wb4.size)

    out_t = pl.pallas_call(
        _mlp_kernel,
        out_shape=jax.ShapeDtypeStruct((out_features, B), x.dtype),
        grid=grid,
        in_specs=[
            pl.BlockSpec((in_features, tile_b), lambda i: (0, i)),   # x^T, tiled on batch
            resident(wb1), resident(wb2), resident(wb3), resident(wb4),
        ],
        out_specs=pl.BlockSpec((out_features, tile_b), lambda i: (0, i)),
        compiler_params=pltpu.CompilerParams(
            dimension_semantics=("parallel",)),
        cost_estimate=pl.CostEstimate(
            flops=2 * B * (wb1.size + wb2.size + wb3.size + wb4.size),
            transcendentals=0,
            bytes_accessed=4 * (x.size + B * out_features) + param_bytes),
    )(xt, wb1, wb2, wb3, wb4)

    return out_t.T                             # back to (B, out_features)


def _init_params(key, in_features=2, hidden_dim=4, out_features=1):
    # PyTorch nn.Linear default init: U(-1/sqrt(fan_in), +1/sqrt(fan_in)).
    keys = jax.random.split(key, 8)

    def uni(k, shape, fan_in):
        bound = 1.0 / jnp.sqrt(fan_in)
        return jax.random.uniform(k, shape, jnp.float32, -bound, bound)

    return {
        "w1": uni(keys[0], (hidden_dim, in_features), in_features),
        "b1": uni(keys[1], (hidden_dim,), in_features),
        "w2": uni(keys[2], (hidden_dim, hidden_dim), hidden_dim),
        "b2": uni(keys[3], (hidden_dim,), hidden_dim),
        "w3": uni(keys[4], (hidden_dim, hidden_dim), hidden_dim),
        "b3": uni(keys[5], (hidden_dim,), hidden_dim),
        "w4": uni(keys[6], (out_features, hidden_dim), hidden_dim),
        "b4": uni(keys[7], (out_features,), hidden_dim),
    }


def _reference(x, p):
    h = jnp.maximum(x @ p["w1"].T + p["b1"], 0.0)
    h = jnp.maximum(h @ p["w2"].T + p["b2"], 0.0)
    h = jnp.maximum(h @ p["w3"].T + p["b3"], 0.0)
    return h @ p["w4"].T + p["b4"]


if __name__ == "__main__":
    key = jax.random.PRNGKey(0)
    k_x, k_p = jax.random.split(key)

    in_features, hidden_dim, out_features = 2, 4, 1
    batch = 1024  # two full 512-lane grid steps

    params = _init_params(k_p, in_features, hidden_dim, out_features)
    packed = prepare_params(params)  # one-time parameter packing
    x = jax.random.normal(k_x, (batch, in_features), jnp.float32)

    out = jax.block_until_ready(l3_relu_lr(x, packed))
    ref = _reference(x, params)

    assert out.shape == (batch, out_features), out.shape
    assert jnp.allclose(out, ref, atol=1e-5, rtol=1e-5), (out, ref)
    print("KERNEL_OK")
</pallas_src>

<mosaic_0001>
module attributes {stable_mosaic.version = 11 : i64} {
  func.func @_mlp_kernel(%arg0: i32, %arg1: memref<2x512xf32, #tpu.memory_space<vmem>>, %arg2: memref<4x3xf32, #tpu.memory_space<vmem>>, %arg3: memref<4x5xf32, #tpu.memory_space<vmem>>, %arg4: memref<4x5xf32, #tpu.memory_space<vmem>>, %arg5: memref<1x5xf32, #tpu.memory_space<vmem>>, %arg6: memref<1x512xf32, #tpu.memory_space<vmem>>) attributes {dimension_semantics = [#tpu.dimension_semantics<parallel>], iteration_bounds = array<i64: 2>, scalar_prefetch = 0 : i64, scratch_operands = 0 : i64, tpu.core_type = #tpu.core_type<tc>, window_params = [{transform_indices = @transform_0, window_bounds = array<i64: 2, 512>}, {pipeline_mode = #tpu.pipeline_mode<synchronous>, transform_indices = @transform_1, window_bounds = array<i64: 4, 3>}, {pipeline_mode = #tpu.pipeline_mode<synchronous>, transform_indices = @transform_2, window_bounds = array<i64: 4, 5>}, {pipeline_mode = #tpu.pipeline_mode<synchronous>, transform_indices = @transform_3, window_bounds = array<i64: 4, 5>}, {pipeline_mode = #tpu.pipeline_mode<synchronous>, transform_indices = @transform_4, window_bounds = array<i64: 1, 5>}, {transform_indices = @transform_5, window_bounds = array<i64: 1, 512>}]} {
    %c0 = arith.constant 0 : index
    %c0_0 = arith.constant 0 : index
    %0 = vector.load %arg1[%c0, %c0_0] : memref<2x512xf32, #tpu.memory_space<vmem>>, vector<2x512xf32>
    %c0_1 = arith.constant 0 : index
    %c2 = arith.constant 2 : index
    %1 = vector.load %arg2[%c0_1, %c2] : memref<4x3xf32, #tpu.memory_space<vmem>>, vector<4x1xf32>
    %2 = vector.shape_cast %1 : vector<4x1xf32> to vector<4x1xf32>
    %3 = vector.broadcast %2 : vector<4x1xf32> to vector<4x512xf32>
    %c0_2 = arith.constant 0 : index
    %c0_3 = arith.constant 0 : index
    %4 = vector.load %arg2[%c0_2, %c0_3] : memref<4x3xf32, #tpu.memory_space<vmem>>, vector<4x1xf32>
    %5 = vector.extract_strided_slice %0 {offsets = [0, 0], sizes = [1, 512], strides = [1, 1]} : vector<2x512xf32> to vector<1x512xf32>
    %6 = vector.broadcast %4 : vector<4x1xf32> to vector<4x512xf32>
    %7 = vector.broadcast %5 : vector<1x512xf32> to vector<4x512xf32>
    %8 = arith.mulf %6, %7 : vector<4x512xf32>
    %9 = arith.addf %3, %8 : vector<4x512xf32>
    %c0_4 = arith.constant 0 : index
    %c1 = arith.constant 1 : index
    %10 = vector.load %arg2[%c0_4, %c1] : memref<4x3xf32, #tpu.memory_space<vmem>>, vector<4x1xf32>
    %11 = vector.extract_strided_slice %0 {offsets = [1, 0], sizes = [1, 512], strides = [1, 1]} : vector<2x512xf32> to vector<1x512xf32>
    %12 = vector.broadcast %10 : vector<4x1xf32> to vector<4x512xf32>
    %13 = vector.broadcast %11 : vector<1x512xf32> to vector<4x512xf32>
    %14 = arith.mulf %12, %13 : vector<4x512xf32>
    %15 = arith.addf %9, %14 : vector<4x512xf32>
    %cst = arith.constant 0.000000e+00 : f32
    %16 = vector.broadcast %cst : f32 to vector<4x512xf32>
    %17 = arith.maximumf %15, %16 : vector<4x512xf32>
    %c0_5 = arith.constant 0 : index
    %c4 = arith.constant 4 : index
    %18 = vector.load %arg3[%c0_5, %c4] : memref<4x5xf32, #tpu.memory_space<vmem>>, vector<4x1xf32>
    %19 = vector.shape_cast %18 : vector<4x1xf32> to vector<4x1xf32>
    %20 = vector.broadcast %19 : vector<4x1xf32> to vector<4x512xf32>
    %c0_6 = arith.constant 0 : index
    %c0_7 = arith.constant 0 : index
    %21 = vector.load %arg3[%c0_6, %c0_7] : memref<4x5xf32, #tpu.memory_space<vmem>>, vector<4x1xf32>
    %22 = vector.extract_strided_slice %17 {offsets = [0, 0], sizes = [1, 512], strides = [1, 1]} : vector<4x512xf32> to vector<1x512xf32>
    %23 = vector.broadcast %21 : vector<4x1xf32> to vector<4x512xf32>
    %24 = vector.broadcast %22 : vector<1x512xf32> to vector<4x512xf32>
    %25 = arith.mulf %23, %24 : vector<4x512xf32>
    %26 = arith.addf %20, %25 : vector<4x512xf32>
    %c0_8 = arith.constant 0 : index
    %c1_9 = arith.constant 1 : index
    %27 = vector.load %arg3[%c0_8, %c1_9] : memref<4x5xf32, #tpu.memory_space<vmem>>, vector<4x1xf32>
    %28 = vector.extract_strided_slice %17 {offsets = [1, 0], sizes = [1, 512], strides = [1, 1]} : vector<4x512xf32> to vector<1x512xf32>
    %29 = vector.broadcast %27 : vector<4x1xf32> to vector<4x512xf32>
    %30 = vector.broadcast %28 : vector<1x512xf32> to vector<4x512xf32>
    %31 = arith.mulf %29, %30 : vector<4x512xf32>
    %32 = arith.addf %26, %31 : vector<4x512xf32>
    %c0_10 = arith.constant 0 : index
    %c2_11 = arith.constant 2 : index
    %33 = vector.load %arg3[%c0_10, %c2_11] : memref<4x5xf32, #tpu.memory_space<vmem>>, vector<4x1xf32>
    %34 = vector.extract_strided_slice %17 {offsets = [2, 0], sizes = [1, 512], strides = [1, 1]} : vector<4x512xf32> to vector<1x512xf32>
    %35 = vector.broadcast %33 : vector<4x1xf32> to vector<4x512xf32>
    %36 = vector.broadcast %34 : vector<1x512xf32> to vector<4x512xf32>
    %37 = arith.mulf %35, %36 : vector<4x512xf32>
    %38 = arith.addf %32, %37 : vector<4x512xf32>
    %c0_12 = arith.constant 0 : index
    %c3 = arith.constant 3 : index
    %39 = vector.load %arg3[%c0_12, %c3] : memref<4x5xf32, #tpu.memory_space<vmem>>, vector<4x1xf32>
    %40 = vector.extract_strided_slice %17 {offsets = [3, 0], sizes = [1, 512], strides = [1, 1]} : vector<4x512xf32> to vector<1x512xf32>
    %41 = vector.broadcast %39 : vector<4x1xf32> to vector<4x512xf32>
    %42 = vector.broadcast %40 : vector<1x512xf32> to vector<4x512xf32>
    %43 = arith.mulf %41, %42 : vector<4x512xf32>
    %44 = arith.addf %38, %43 : vector<4x512xf32>
    %cst_13 = arith.constant 0.000000e+00 : f32
    %45 = vector.broadcast %cst_13 : f32 to vector<4x512xf32>
    %46 = arith.maximumf %44, %45 : vector<4x512xf32>
    %c0_14 = arith.constant 0 : index
    %c4_15 = arith.constant 4 : index
    %47 = vector.load %arg4[%c0_14, %c4_15] : memref<4x5xf32, #tpu.memory_space<vmem>>, vector<4x1xf32>
    %48 = vector.shape_cast %47 : vector<4x1xf32> to vector<4x1xf32>
    %49 = vector.broadcast %48 : vector<4x1xf32> to vector<4x512xf32>
    %c0_16 = arith.constant 0 : index
    %c0_17 = arith.constant 0 : index
    %50 = vector.load %arg4[%c0_16, %c0_17] : memref<4x5xf32, #tpu.memory_space<vmem>>, vector<4x1xf32>
    %51 = vector.extract_strided_slice %46 {offsets = [0, 0], sizes = [1, 512], strides = [1, 1]} : vector<4x512xf32> to vector<1x512xf32>
    %52 = vector.broadcast %50 : vector<4x1xf32> to vector<4x512xf32>
    %53 = vector.broadcast %51 : vector<1x512xf32> to vector<4x512xf32>
    %54 = arith.mulf %52, %53 : vector<4x512xf32>
    %55 = arith.addf %49, %54 : vector<4x512xf32>
    %c0_18 = arith.constant 0 : index
    %c1_19 = arith.constant 1 : index
    %56 = vector.load %arg4[%c0_18, %c1_19] : memref<4x5xf32, #tpu.memory_space<vmem>>, vector<4x1xf32>
    %57 = vector.extract_strided_slice %46 {offsets = [1, 0], sizes = [1, 512], strides = [1, 1]} : vector<4x512xf32> to vector<1x512xf32>
    %58 = vector.broadcast %56 : vector<4x1xf32> to vector<4x512xf32>
    %59 = vector.broadcast %57 : vector<1x512xf32> to vector<4x512xf32>
    %60 = arith.mulf %58, %59 : vector<4x512xf32>
    %61 = arith.addf %55, %60 : vector<4x512xf32>
    %c0_20 = arith.constant 0 : index
    %c2_21 = arith.constant 2 : index
    %62 = vector.load %arg4[%c0_20, %c2_21] : memref<4x5xf32, #tpu.memory_space<vmem>>, vector<4x1xf32>
    %63 = vector.extract_strided_slice %46 {offsets = [2, 0], sizes = [1, 512], strides = [1, 1]} : vector<4x512xf32> to vector<1x512xf32>
    %64 = vector.broadcast %62 : vector<4x1xf32> to vector<4x512xf32>
    %65 = vector.broadcast %63 : vector<1x512xf32> to vector<4x512xf32>
    %66 = arith.mulf %64, %65 : vector<4x512xf32>
    %67 = arith.addf %61, %66 : vector<4x512xf32>
    %c0_22 = arith.constant 0 : index
    %c3_23 = arith.constant 3 : index
    %68 = vector.load %arg4[%c0_22, %c3_23] : memref<4x5xf32, #tpu.memory_space<vmem>>, vector<4x1xf32>
    %69 = vector.extract_strided_slice %46 {offsets = [3, 0], sizes = [1, 512], strides = [1, 1]} : vector<4x512xf32> to vector<1x512xf32>
    %70 = vector.broadcast %68 : vector<4x1xf32> to vector<4x512xf32>
    %71 = vector.broadcast %69 : vector<1x512xf32> to vector<4x512xf32>
    %72 = arith.mulf %70, %71 : vector<4x512xf32>
    %73 = arith.addf %67, %72 : vector<4x512xf32>
    %cst_24 = arith.constant 0.000000e+00 : f32
    %74 = vector.broadcast %cst_24 : f32 to vector<4x512xf32>
    %75 = arith.maximumf %73, %74 : vector<4x512xf32>
    %c0_25 = arith.constant 0 : index
    %c4_26 = arith.constant 4 : index
    %76 = vector.load %arg5[%c0_25, %c4_26] : memref<1x5xf32, #tpu.memory_space<vmem>>, vector<1x1xf32>
    %77 = vector.shape_cast %76 : vector<1x1xf32> to vector<1x1xf32>
    %78 = vector.broadcast %77 : vector<1x1xf32> to vector<1x512xf32>
    %c0_27 = arith.constant 0 : index
    %c0_28 = arith.constant 0 : index
    %79 = vector.load %arg5[%c0_27, %c0_28] : memref<1x5xf32, #tpu.memory_space<vmem>>, vector<1x1xf32>
    %80 = vector.extract_strided_slice %75 {offsets = [0, 0], sizes = [1, 512], strides = [1, 1]} : vector<4x512xf32> to vector<1x512xf32>
    %81 = vector.broadcast %79 : vector<1x1xf32> to vector<1x512xf32>
    %82 = arith.mulf %81, %80 : vector<1x512xf32>
    %83 = arith.addf %78, %82 : vector<1x512xf32>
    %c0_29 = arith.constant 0 : index
    %c1_30 = arith.constant 1 : index
    %84 = vector.load %arg5[%c0_29, %c1_30] : memref<1x5xf32, #tpu.memory_space<vmem>>, vector<1x1xf32>
    %85 = vector.extract_strided_slice %75 {offsets = [1, 0], sizes = [1, 512], strides = [1, 1]} : vector<4x512xf32> to vector<1x512xf32>
    %86 = vector.broadcast %84 : vector<1x1xf32> to vector<1x512xf32>
    %87 = arith.mulf %86, %85 : vector<1x512xf32>
    %88 = arith.addf %83, %87 : vector<1x512xf32>
    %c0_31 = arith.constant 0 : index
    %c2_32 = arith.constant 2 : index
    %89 = vector.load %arg5[%c0_31, %c2_32] : memref<1x5xf32, #tpu.memory_space<vmem>>, vector<1x1xf32>
    %90 = vector.extract_strided_slice %75 {offsets = [2, 0], sizes = [1, 512], strides = [1, 1]} : vector<4x512xf32> to vector<1x512xf32>
    %91 = vector.broadcast %89 : vector<1x1xf32> to vector<1x512xf32>
    %92 = arith.mulf %91, %90 : vector<1x512xf32>
    %93 = arith.addf %88, %92 : vector<1x512xf32>
    %c0_33 = arith.constant 0 : index
    %c3_34 = arith.constant 3 : index
    %94 = vector.load %arg5[%c0_33, %c3_34] : memref<1x5xf32, #tpu.memory_space<vmem>>, vector<1x1xf32>
    %95 = vector.extract_strided_slice %75 {offsets = [3, 0], sizes = [1, 512], strides = [1, 1]} : vector<4x512xf32> to vector<1x512xf32>
    %96 = vector.broadcast %94 : vector<1x1xf32> to vector<1x512xf32>
    %97 = arith.mulf %96, %95 : vector<1x512xf32>
    %98 = arith.addf %93, %97 : vector<1x512xf32>
    %c0_35 = arith.constant 0 : index
    %c0_36 = arith.constant 0 : index
    %99 = vector.load %arg6[%c0_35, %c0_36] : memref<1x512xf32, #tpu.memory_space<vmem>>, vector<1x512xf32>
    tpu.vector_store %arg6[%c0_35, %c0_36], %98 {strides = array<i32>} : memref<1x512xf32, #tpu.memory_space<vmem>>, vector<1x512xf32>,
    return
  }
  func.func @transform_0(%arg0: i32) -> (i32, i32) {
    %c0_i32 = arith.constant 0 : i32
    %c0_i32_0 = arith.constant 0 : i32
    return %c0_i32, %arg0 : i32, i32
  }
  func.func @transform_1(%arg0: i32) -> (i32, i32) {
    %c0_i32 = arith.constant 0 : i32
    %c0_i32_0 = arith.constant 0 : i32
    %c0_i32_1 = arith.constant 0 : i32
    return %c0_i32, %c0_i32_0 : i32, i32
  }
  func.func @transform_2(%arg0: i32) -> (i32, i32) {
    %c0_i32 = arith.constant 0 : i32
    %c0_i32_0 = arith.constant 0 : i32
    %c0_i32_1 = arith.constant 0 : i32
    return %c0_i32, %c0_i32_0 : i32, i32
  }
  func.func @transform_3(%arg0: i32) -> (i32, i32) {
    %c0_i32 = arith.constant 0 : i32
    %c0_i32_0 = arith.constant 0 : i32
    %c0_i32_1 = arith.constant 0 : i32
    return %c0_i32, %c0_i32_0 : i32, i32
  }
  func.func @transform_4(%arg0: i32) -> (i32, i32) {
    %c0_i32 = arith.constant 0 : i32
    %c0_i32_0 = arith.constant 0 : i32
    %c0_i32_1 = arith.constant 0 : i32
    return %c0_i32, %c0_i32_0 : i32, i32
  }
  func.func @transform_5(%arg0: i32) -> (i32, i32) {
    %c0_i32 = arith.constant 0 : i32
    %c0_i32_0 = arith.constant 0 : i32
    return %c0_i32, %arg0 : i32, i32
  }
}

</mosaic_0001>

<llo_original>
// kernel: tpu_custom_call.1
$region0: #{tpu_custom_call.1}
  #allocation0 [shape = 'u32[]', space=smem, size = 0x4, offset = 0x4, fixed_abs, tag = 'smem constant byte address 0x4 - core index']
  #allocation1 [shape = 'u32[144,128]{1,0:T(1,128)}', space=vmem, size = 0x12000, scoped, tag = 'internal scratch']
  %s0 = inlined_call_operand.hbm [shape: f32[2,1024], index: 0, kind: input, shape index: {}]
  %s1 = inlined_call_operand.hbm [shape: f32[4,3], index: 1, kind: input, shape index: {}]
  %s2 = inlined_call_operand.vmem [shape: f32[4,5], index: 2, kind: input, shape index: {}]
  %s3 = inlined_call_operand.vmem [shape: f32[4,5], index: 3, kind: input, shape index: {}]
  %s4 = inlined_call_operand.vmem [shape: f32[1,5], index: 4, kind: input, shape index: {}]
  %s5 = inlined_call_operand.hbm [shape: f32[1,1024], index: 5, kind: output, shape index: {}]
  %s6 = sld [smem:[#allocation0]]
  $region61: #{tpu_custom_call.1} parent=0
    _
  %s8 = ssub.s32 1, %s6
  %s9 = scalar_select 0, %s8, %s6
  $region1: #{tpu_custom_call.1} parent=0
    #allocation2 [shape = 'u8[8192]{0}', space=vmem, size = 0x2000, scoped, tag = 'input window, operand 0']
    #allocation3 [shape = 's32[2]{0}', space=sflag, size = 0x8, scoped, tag = 'scoped memory for tpu_custom_call.1']
    #allocation4 [shape = 's32[2]{0}', space=sflag, size = 0x8, scoped, tag = 'scoped memory for tpu_custom_call.1']
    #allocation5 [shape = 'u8[2048]{0}', space=vmem, size = 0x800, scoped, tag = 'input window, operand 1, single buffered']
    #allocation6 [shape = 's32[1]{0}', space=sflag, size = 0x4, scoped, tag = 'scoped memory for tpu_custom_call.1']
    #allocation7 [shape = 'u8[4096]{0}', space=vmem, size = 0x1000, scoped, tag = 'output window, operand 0']
    %10 = vsyncpa [#allocation3], 0
    %s11 = scalar_lea.sflag [#allocation3], 1
    %12 = vsyncpa %s11, 0
    %13 = vsyncpa [#allocation6], 0
    %14 = vsyncpa [#allocation4], 0
    %s15 = scalar_lea.sflag [#allocation4], 1
    %16 = vsyncpa %s15, 0
    loop: start=0, step=1, limit=4
    $region2: #{tpu_custom_call.1} parent=1 // loop_pre_header
      _
    $region3: #{tpu_custom_call.1} parent=1 // loop_header
      %s18 = sphi 0, %s22
      %p19 = scmp.ge.s32.totalorder %s18, 4
      %s28 = sphi 0, %s30
      %s31 = sphi 0, %s28
      %s32 = sphi 0, %s31
      %s48 = sphi 0, %s32
      %s52 = sphi 0, %s52
      %s54 = sphi 0, %s52
      %s55 = sphi 0, %s54
      %s69 = sphi 0, %s55
      %s73 = sphi 0, %s73
      %s75 = sphi 0, %s73
      %s76 = sphi 0, %s75
      %s90 = sphi 0, %s76
      %s94 = sphi 0, %s94
      %s96 = sphi 0, %s94
      %s97 = sphi 0, %s96
      %s111 = sphi 0, %s97
      %s115 = sphi 0, %s115
      %s117 = sphi 0, %s115
      %s118 = sphi 0, %s117
      %s132 = sphi 0, %s118
      %s138 = sphi 0, %s140
      %s141 = sphi 0, %s138
      %s142 = sphi 0, %s141
      %s158 = sphi 0, %s142
    $region4: #{tpu_custom_call.1} parent=1 // loop_header_branch
      %21 = sbr.rel (%p19) target = $region8
    $region5: #{tpu_custom_call.1} parent=1 // loop_body
      %s23 = ssub.s32 %s18, 1
      %s24 = ssub.s32 %s18, 2
      %s25 = sadd.s32 %s18, 1
      %s26 = ssub.s32 %s18, %s25
      %p27 = scmp.eq.s32.totalorder %s26, 0
      %s29 = sadd.s32 %s28, 1
      %s30 = scalar_select %p27, %s28, %s29
      %p33 = pneg %p27
      %p34 = scmp.eq.s32.totalorder %s18, 1
      %p35 = por %p33, %p34
      %p36 = scmp.ne.s32.totalorder %s28, %s31
      %p37 = scmp.eq.s32.totalorder %s18, 0
      %p38 = por %p36, %p37
      %p39 = scmp.ne.s32.totalorder %s28, %s31
      %p40 = scmp.eq.s32.totalorder %s23, 1
      %p41 = por %p39, %p40
      %p42 = scmp.ne.s32.totalorder %s31, %s32
      %p43 = scmp.eq.s32.totalorder %s23, 0
      %p44 = por %p42, %p43
      %p45 = scmp.ne.s32.totalorder %s31, %s32
      %p46 = scmp.eq.s32.totalorder %s24, 1
      %p47 = por %p45, %p46
      %p49 = scmp.ne.s32.totalorder %s32, %s48
      %p50 = scmp.eq.s32.totalorder %s24, 0
      %p51 = por %p49, %p50
      %s53 = sadd.s32 %s52, 1
      %p56 = scmp.eq.s32.totalorder %s18, 1
      %p57 = scmp.ne.s32.totalorder %s52, %s54
      %p58 = scmp.eq.s32.totalorder %s18, 0
      %p59 = por %p57, %p58
      %p60 = scmp.ne.s32.totalorder %s52, %s54
      %p61 = scmp.eq.s32.totalorder %s23, 1
      %p62 = por %p60, %p61
      %p63 = scmp.ne.s32.totalorder %s54, %s55
      %p64 = scmp.eq.s32.totalorder %s23, 0
      %p65 = por %p63, %p64
      %p66 = scmp.ne.s32.totalorder %s54, %s55
      %p67 = scmp.eq.s32.totalorder %s24, 1
      %p68 = por %p66, %p67
      %p70 = scmp.ne.s32.totalorder %s55, %s69
      %p71 = scmp.eq.s32.totalorder %s24, 0
      %p72 = por %p70, %p71
      %s74 = sadd.s32 %s73, 1
      %p77 = scmp.eq.s32.totalorder %s18, 1
      %p78 = scmp.ne.s32.totalorder %s73, %s75
      %p79 = scmp.eq.s32.totalorder %s18, 0
      %p80 = por %p78, %p79
      %p81 = scmp.ne.s32.totalorder %s73, %s75
      %p82 = scmp.eq.s32.totalorder %s23, 1
      %p83 = por %p81, %p82
      %p84 = scmp.ne.s32.totalorder %s75, %s76
      %p85 = scmp.eq.s32.totalorder %s23, 0
      %p86 = por %p84, %p85
      %p87 = scmp.ne.s32.totalorder %s75, %s76
      %p88 = scmp.eq.s32.totalorder %s24, 1
      %p89 = por %p87, %p88
      %p91 = scmp.ne.s32.totalorder %s76, %s90
      %p92 = scmp.eq.s32.totalorder %s24, 0
      %p93 = por %p91, %p92
      %s95 = sadd.s32 %s94, 1
      %p98 = scmp.eq.s32.totalorder %s18, 1
      %p99 = scmp.ne.s32.totalorder %s94, %s96
      %p100 = scmp.eq.s32.totalorder %s18, 0
      %p101 = por %p99, %p100
      %p102 = scmp.ne.s32.totalorder %s94, %s96
      %p103 = scmp.eq.s32.totalorder %s23, 1
      %p104 = por %p102, %p103
      %p105 = scmp.ne.s32.totalorder %s96, %s97
      %p106 = scmp.eq.s32.totalorder %s23, 0
      %p107 = por %p105, %p106
      %p108 = scmp.ne.s32.totalorder %s96, %s97
      %p109 = scmp.eq.s32.totalorder %s24, 1
      %p110 = por %p108, %p109
      %p112 = scmp.ne.s32.totalorder %s97, %s111
      %p113 = scmp.eq.s32.totalorder %s24, 0
      %p114 = por %p112, %p113
      %s116 = sadd.s32 %s115, 1
      %p119 = scmp.eq.s32.totalorder %s18, 1
      %p120 = scmp.ne.s32.totalorder %s115, %s117
      %p121 = scmp.eq.s32.totalorder %s18, 0
      %p122 = por %p120, %p121
      %p123 = scmp.ne.s32.totalorder %s115, %s117
      %p124 = scmp.eq.s32.totalorder %s23, 1
      %p125 = por %p123, %p124
      %p126 = scmp.ne.s32.totalorder %s117, %s118
      %p127 = scmp.eq.s32.totalorder %s23, 0
      %p128 = por %p126, %p127
      %p129 = scmp.ne.s32.totalorder %s117, %s118
      %p130 = scmp.eq.s32.totalorder %s24, 1
      %p131 = por %p129, %p130
      %p133 = scmp.ne.s32.totalorder %s118, %s132
      %p134 = scmp.eq.s32.totalorder %s24, 0
      %p135 = por %p133, %p134
      %s136 = ssub.s32 %s18, %s25
      %p137 = scmp.eq.s32.totalorder %s136, 0
      %s139 = sadd.s32 %s138, 1
      %s140 = scalar_select %p137, %s138, %s139
      %p143 = pneg %p137
      %p144 = scmp.eq.s32.totalorder %s18, 1
      %p145 = por %p143, %p144
      %p146 = scmp.ne.s32.totalorder %s138, %s141
      %p147 = scmp.eq.s32.totalorder %s18, 0
      %p148 = por %p146, %p147
      %p149 = scmp.ne.s32.totalorder %s138, %s141
      %p150 = scmp.eq.s32.totalorder %s23, 1
      %p151 = por %p149, %p150
      %p152 = scmp.ne.s32.totalorder %s141, %s142
      %p153 = scmp.eq.s32.totalorder %s23, 0
      %p154 = por %p152, %p153
      %p155 = scmp.ne.s32.totalorder %s141, %s142
      %p156 = scmp.eq.s32.totalorder %s24, 1
      %p157 = por %p155, %p156
      %p159 = scmp.ne.s32.totalorder %s142, %s158
      %p160 = scmp.eq.s32.totalorder %s24, 0
      %p161 = por %p159, %p160
      %p162 = scmp.le.s32.totalorder 1, %s18
      %p163 = scmp.lt.s32.totalorder %s18, 3
      %p164 = pnand %p162, %p163
      %p165 = pneg %p164
      // Predicated region
      $region9: #{tpu_custom_call.1} parent=5 // pred_check
        _
      $region10: #{tpu_custom_call.1} parent=5 // pred_check_branch
        %167 = sbr.rel (%p164) target = $region12
      $region11: #{tpu_custom_call.1} parent=5 // pred_region
        %s168 = ssub.s32 %s18, 1
        // Predicated region
        $region13: #{tpu_custom_call.1} parent=11 // pred_check
          %p169 = pneg %p65
        $region14: #{tpu_custom_call.1} parent=11 // pred_check_branch
          %171 = sbr.rel (%p169) target = $region16
        $region15: #{tpu_custom_call.1} parent=11 // pred_region
          %s173 = ssub.s32 64, 64
          %174 = vsyncadd [#allocation6], %s173
          %s176 = sshll.u32 [#allocation5], 4
          %s177 = int_to_ptr.vmem [resolvable:$true] %s176
          %179 = dma.hbm_to_vmem [thread:$0]  %s1, 64, %s177, [#allocation6]
        $region16: #{tpu_custom_call.1} parent=11 // pred_fallthru
          _
        // Predicated region
        $region17: #{tpu_custom_call.1} parent=11 // pred_check
          %p180 = pneg %p86
        $region18: #{tpu_custom_call.1} parent=11 // pred_check_branch
          %182 = sbr.rel (%p180) target = $region20
        $region19: #{tpu_custom_call.1} parent=11 // pred_region
          _
        $region20: #{tpu_custom_call.1} parent=11 // pred_fallthru
          _
        // Predicated region
        $region21: #{tpu_custom_call.1} parent=11 // pred_check
          %p183 = pneg %p107
        $region22: #{tpu_custom_call.1} parent=11 // pred_check_branch
          %185 = sbr.rel (%p183) target = $region24
        $region23: #{tpu_custom_call.1} parent=11 // pred_region
          _
        $region24: #{tpu_custom_call.1} parent=11 // pred_fallthru
          _
        // Predicated region
        $region25: #{tpu_custom_call.1} parent=11 // pred_check
          %p186 = pneg %p128
        $region26: #{tpu_custom_call.1} parent=11 // pred_check_branch
          %188 = sbr.rel (%p186) target = $region28
        $region27: #{tpu_custom_call.1} parent=11 // pred_region
          _
        $region28: #{tpu_custom_call.1} parent=11 // pred_fallthru
          _
      $region12: #{tpu_custom_call.1} parent=5 // pred_fallthru
        _
      %p189 = scmp.lt.s32.totalorder %s18, 2
      // Predicated region
      $region29: #{tpu_custom_call.1} parent=5 // pred_check
        %p190 = pneg %p189
      $region30: #{tpu_custom_call.1} parent=5 // pred_check_branch
        %192 = sbr.rel (%p190) target = $region32
      $region31: #{tpu_custom_call.1} parent=5 // pred_region
        // Predicated region
        $region33: #{tpu_custom_call.1} parent=31 // pred_check
          %p193 = pneg %p38
        $region34: #{tpu_custom_call.1} parent=31 // pred_check_branch
          %195 = sbr.rel (%p193) target = $region36
        $region35: #{tpu_custom_call.1} parent=31 // pred_region
          %s196 = sand.u32 %s28, 1
          %s197 = scalar_lea.sflag [#allocation3], %s196
          %s198 = sand.u32 %s28, 1
          %s199 = smul.addr %s198, 8
          %s200 = scalar_lea.vmem [#allocation2], %s199
          %s201 = smul.u32 4, %s18
          %s203 = ssub.s32 128, 128
          %204 = vsyncadd %s197, %s203
          %s205 = smul.addr %s201, 32
          %s206 = scalar_lea.hbm %s0, %s205
          %s208 = sshll.u32 %s200, 4
          %s209 = int_to_ptr.vmem [resolvable:$true] %s208
          %211 = dma.hbm_to_vmem [thread:$0]  %s206, 128, %s209, %s197
        $region36: #{tpu_custom_call.1} parent=31 // pred_fallthru
          _
      $region32: #{tpu_custom_call.1} parent=5 // pred_fallthru
        _
      %p212 = scmp.le.s32.totalorder 1, %s18
      %p213 = scmp.lt.s32.totalorder %s18, 3
      %p214 = pnand %p212, %p213
      %p215 = pneg %p214
      // Predicated region
      $region37: #{tpu_custom_call.1} parent=5 // pred_check
        _
      $region38: #{tpu_custom_call.1} parent=5 // pred_check_branch
        %217 = sbr.rel (%p214) target = $region40
      $region39: #{tpu_custom_call.1} parent=5 // pred_region
        %s218 = ssub.s32 %s18, 1
        %s219 = sand.u32 %s31, 1
        %s220 = scalar_lea.sflag [#allocation3], %s219
        %s221 = sand.u32 %s31, 1
        %s222 = smul.addr %s221, 8
        %s223 = scalar_lea.vmem [#allocation2], %s222
        // Predicated region
        $region41: #{tpu_custom_call.1} parent=39 // pred_check
          %p224 = pneg %p44
        $region42: #{tpu_custom_call.1} parent=39 // pred_check_branch
          %226 = sbr.rel (%p224) target = $region44
        $region43: #{tpu_custom_call.1} parent=39 // pred_region
          %227 = dma.done %s220, 128
        $region44: #{tpu_custom_call.1} parent=39 // pred_fallthru
          _
        // Predicated region
        $region45: #{tpu_custom_call.1} parent=39 // pred_check
          %p228 = pneg %p65
        $region46: #{tpu_custom_call.1} parent=39 // pred_check_branch
          %230 = sbr.rel (%p228) target = $region48
        $region47: #{tpu_custom_call.1} parent=39 // pred_region
          %231 = dma.done [#allocation6], 64
        $region48: #{tpu_custom_call.1} parent=39 // pred_fallthru
          _
        %s232 = sand.u32 %s31, 1
        %s233 = scalar_lea.sflag [#allocation3], %s232
        %s234 = sand.u32 %s31, 1
        %s235 = smul.addr %s234, 8
        %s236 = scalar_lea.vmem [#allocation2], %s235
        %p237 = pneg %p44
        %p238 = pneg %p41
        %p239 = pneg %p65
        %p240 = pneg %p62
        %p241 = pneg %p86
        %p242 = pneg %p83
        %p243 = pneg %p107
        %p244 = pneg %p104
        %p245 = pneg %p128
        %p246 = pneg %p125
        %p247 = pneg %p154
        %p248 = pneg %p151
        %s249 = sand.u32 %s141, 1
        %s250 = scalar_lea.sflag [#allocation4], %s249
        %s251 = sand.u32 %s141, 1
        %s252 = smul.addr %s251, 4
        %s253 = scalar_lea.vmem [#allocation7], %s252
        %s254 = smul.u32 4, %s23
        %s255 = smul.u32 4, %s23
        %v256 = vld [vmem:[%s223] sm:$0xff]
        %v257 = vld [vmem:[#allocation5] sm:$0xf]
        %259 = vset.pattern.permute.xlu0 2
        %260 = vperm.xlu0 %259, %v257
        %v261 = vpop.permute.xlu0 %260
        %263 = vset.pattern.permute.xlu0 0
        %264 = vperm.xlu0 %263, %v257
        %v265 = vpop.permute.xlu0 %264
        %v268 = vlaneseq
        %v269 = vshrl.u32 %v268, 7
        %v270 = vsub.s32 0, %v269
        %v271 = vrot.slane %v256, %v270
        %v272 = vlaneseq
        %v273 = vshrl.u32 %v272, 7
        %v274 = vsub.s32 2, %v273
        %v275 = vrot.slane %v256, %v274
        %v276 = vlaneseq
        %v277 = vshrl.u32 %v276, 7
        %v278 = vsub.s32 4, %v277
        %v279 = vrot.slane %v256, %v278
        %v280 = vlaneseq
        %v281 = vshrl.u32 %v280, 7
        %v282 = vsub.s32 6, %v281
        %v283 = vrot.slane %v256, %v282
        %v288 = vlaneseq
        %v289 = vshrl.u32 %v288, 7
        %v290 = vsub.s32 0, %v289
        %v291 = vrot.slane %v271, %v290
        %v292 = vlaneseq
        %v293 = vshrl.u32 %v292, 7
        %v294 = vsub.s32 0, %v293
        %v295 = vrot.slane %v275, %v294
        %v296 = vlaneseq
        %v297 = vshrl.u32 %v296, 7
        %v298 = vsub.s32 0, %v297
        %v299 = vrot.slane %v279, %v298
        %v300 = vlaneseq
        %v301 = vshrl.u32 %v300, 7
        %v302 = vsub.s32 0, %v301
        %v303 = vrot.slane %v283, %v302
        %v304 = vmul.f32 %v265, %v291
        %v305 = vmul.f32 %v265, %v295
        %v306 = vmul.f32 %v265, %v299
        %v307 = vmul.f32 %v265, %v303
        %v308 = vadd.f32 %v261, %v304
        %v309 = vadd.f32 %v261, %v305
        %v310 = vadd.f32 %v261, %v306
        %v311 = vadd.f32 %v261, %v307
        %312 = vset.pattern.permute.xlu0 1
        %313 = vperm.xlu0 %312, %v257
        %v314 = vpop.permute.xlu0 %313
        %v316 = vlaneseq
        %v317 = vshrl.u32 %v316, 7
        %v318 = vsub.s32 1, %v317
        %v319 = vrot.slane %v256, %v318
        %v320 = vlaneseq
        %v321 = vshrl.u32 %v320, 7
        %v322 = vsub.s32 3, %v321
        %v323 = vrot.slane %v256, %v322
        %v324 = vlaneseq
        %v325 = vshrl.u32 %v324, 7
        %v326 = vsub.s32 5, %v325
        %v327 = vrot.slane %v256, %v326
        %v328 = vlaneseq
        %v329 = vshrl.u32 %v328, 7
        %v330 = vsub.s32 7, %v329
        %v331 = vrot.slane %v256, %v330
        %v336 = vlaneseq
        %v337 = vshrl.u32 %v336, 7
        %v338 = vsub.s32 1, %v337
        %v339 = vrot.slane %v319, %v338
        %v340 = vlaneseq
        %v341 = vshrl.u32 %v340, 7
        %v342 = vsub.s32 1, %v341
        %v343 = vrot.slane %v323, %v342
        %v344 = vlaneseq
        %v345 = vshrl.u32 %v344, 7
        %v346 = vsub.s32 1, %v345
        %v347 = vrot.slane %v327, %v346
        %v348 = vlaneseq
        %v349 = vshrl.u32 %v348, 7
        %v350 = vsub.s32 1, %v349
        %v351 = vrot.slane %v331, %v350
        %v352 = vmul.f32 %v314, %v339
        %v353 = vmul.f32 %v314, %v343
        %v354 = vmul.f32 %v314, %v347
        %v355 = vmul.f32 %v314, %v351
        %v356 = vadd.f32 %v308, %v352
        %v357 = vadd.f32 %v309, %v353
        %v358 = vadd.f32 %v310, %v354
        %v359 = vadd.f32 %v311, %v355
        %v360 = vmax.f32 %v356, 0.0
        %v361 = vmax.f32 %v357, 0.0
        %v362 = vmax.f32 %v358, 0.0
        %v363 = vmax.f32 %v359, 0.0
        %v364 = vld [vmem:[%s2] sm:$0xf]
        %366 = vset.pattern.permute.xlu0 4
        %367 = vperm.xlu0 %366, %v364
        %v368 = vpop.permute.xlu0 %367
        %370 = vset.pattern.permute.xlu0 0
        %371 = vperm.xlu0 %370, %v364
        %v372 = vpop.permute.xlu0 %371
        %v374 = vlaneseq
        %v375 = vshrl.u32 %v374, 7
        %v376 = vsub.s32 0, %v375
        %v377 = vrot.slane %v360, %v376
        %v378 = vlaneseq
        %v379 = vshrl.u32 %v378, 7
        %v380 = vsub.s32 0, %v379
        %v381 = vrot.slane %v361, %v380
        %v382 = vlaneseq
        %v383 = vshrl.u32 %v382, 7
        %v384 = vsub.s32 0, %v383
        %v385 = vrot.slane %v362, %v384
        %v386 = vlaneseq
        %v387 = vshrl.u32 %v386, 7
        %v388 = vsub.s32 0, %v387
        %v389 = vrot.slane %v363, %v388
        %v390 = vmul.f32 %v372, %v377
        %v391 = vmul.f32 %v372, %v381
        %v392 = vmul.f32 %v372, %v385
        %v393 = vmul.f32 %v372, %v389
        %v394 = vadd.f32 %v368, %v390
        %v395 = vadd.f32 %v368, %v391
        %v396 = vadd.f32 %v368, %v392
        %v397 = vadd.f32 %v368, %v393
        %398 = vset.pattern.permute.xlu0 1
        %399 = vperm.xlu0 %398, %v364
        %v400 = vpop.permute.xlu0 %399
        %v402 = vlaneseq
        %v403 = vshrl.u32 %v402, 7
        %v404 = vsub.s32 1, %v403
        %v405 = vrot.slane %v360, %v404
        %v406 = vlaneseq
        %v407 = vshrl.u32 %v406, 7
        %v408 = vsub.s32 1, %v407
        %v409 = vrot.slane %v361, %v408
        %v410 = vlaneseq
        %v411 = vshrl.u32 %v410, 7
        %v412 = vsub.s32 1, %v411
        %v413 = vrot.slane %v362, %v412
        %v414 = vlaneseq
        %v415 = vshrl.u32 %v414, 7
        %v416 = vsub.s32 1, %v415
        %v417 = vrot.slane %v363, %v416
        %v418 = vmul.f32 %v400, %v405
        %v419 = vmul.f32 %v400, %v409
        %v420 = vmul.f32 %v400, %v413
        %v421 = vmul.f32 %v400, %v417
        %v422 = vadd.f32 %v394, %v418
        %v423 = vadd.f32 %v395, %v419
        %v424 = vadd.f32 %v396, %v420
        %v425 = vadd.f32 %v397, %v421
        %426 = vset.pattern.permute.xlu0 2
        %427 = vperm.xlu0 %426, %v364
        %v428 = vpop.permute.xlu0 %427
        %v430 = vlaneseq
        %v431 = vshrl.u32 %v430, 7
        %v432 = vsub.s32 2, %v431
        %v433 = vrot.slane %v360, %v432
        %v434 = vlaneseq
        %v435 = vshrl.u32 %v434, 7
        %v436 = vsub.s32 2, %v435
        %v437 = vrot.slane %v361, %v436
        %v438 = vlaneseq
        %v439 = vshrl.u32 %v438, 7
        %v440 = vsub.s32 2, %v439
        %v441 = vrot.slane %v362, %v440
        %v442 = vlaneseq
        %v443 = vshrl.u32 %v442, 7
        %v444 = vsub.s32 2, %v443
        %v445 = vrot.slane %v363, %v444
        %v446 = vmul.f32 %v428, %v433
        %v447 = vmul.f32 %v428, %v437
        %v448 = vmul.f32 %v428, %v441
        %v449 = vmul.f32 %v428, %v445
        %v450 = vadd.f32 %v422, %v446
        %v451 = vadd.f32 %v423, %v447
        %v452 = vadd.f32 %v424, %v448
        %v453 = vadd.f32 %v425, %v449
        %454 = vset.pattern.permute.xlu0 3
        %455 = vperm.xlu0 %454, %v364
        %v456 = vpop.permute.xlu0 %455
        %v458 = vlaneseq
        %v459 = vshrl.u32 %v458, 7
        %v460 = vsub.s32 3, %v459
        %v461 = vrot.slane %v360, %v460
        %v462 = vlaneseq
        %v463 = vshrl.u32 %v462, 7
        %v464 = vsub.s32 3, %v463
        %v465 = vrot.slane %v361, %v464
        %v466 = vlaneseq
        %v467 = vshrl.u32 %v466, 7
        %v468 = vsub.s32 3, %v467
        %v469 = vrot.slane %v362, %v468
        %v470 = vlaneseq
        %v471 = vshrl.u32 %v470, 7
        %v472 = vsub.s32 3, %v471
        %v473 = vrot.slane %v363, %v472
        %v474 = vmul.f32 %v456, %v461
        %v475 = vmul.f32 %v456, %v465
        %v476 = vmul.f32 %v456, %v469
        %v477 = vmul.f32 %v456, %v473
        %v478 = vadd.f32 %v450, %v474
        %v479 = vadd.f32 %v451, %v475
        %v480 = vadd.f32 %v452, %v476
        %v481 = vadd.f32 %v453, %v477
        %v482 = vmax.f32 %v478, 0.0
        %v483 = vmax.f32 %v479, 0.0
        %v484 = vmax.f32 %v480, 0.0
        %v485 = vmax.f32 %v481, 0.0
        %v486 = vld [vmem:[%s3] sm:$0xf]
        %488 = vset.pattern.permute.xlu0 4
        %489 = vperm.xlu0 %488, %v486
        %v490 = vpop.permute.xlu0 %489
        %492 = vset.pattern.permute.xlu0 0
        %493 = vperm.xlu0 %492, %v486
        %v494 = vpop.permute.xlu0 %493
        %v496 = vlaneseq
        %v497 = vshrl.u32 %v496, 7
        %v498 = vsub.s32 0, %v497
        %v499 = vrot.slane %v482, %v498
        %v500 = vlaneseq
        %v501 = vshrl.u32 %v500, 7
        %v502 = vsub.s32 0, %v501
        %v503 = vrot.slane %v483, %v502
        %v504 = vlaneseq
        %v505 = vshrl.u32 %v504, 7
        %v506 = vsub.s32 0, %v505
        %v507 = vrot.slane %v484, %v506
        %v508 = vlaneseq
        %v509 = vshrl.u32 %v508, 7
        %v510 = vsub.s32 0, %v509
        %v511 = vrot.slane %v485, %v510
        %v512 = vmul.f32 %v494, %v499
        %v513 = vmul.f32 %v494, %v503
        %v514 = vmul.f32 %v494, %v507
        %v515 = vmul.f32 %v494, %v511
        %v516 = vadd.f32 %v490, %v512
        %v517 = vadd.f32 %v490, %v513
        %v518 = vadd.f32 %v490, %v514
        %v519 = vadd.f32 %v490, %v515
        %520 = vset.pattern.permute.xlu0 1
        %521 = vperm.xlu0 %520, %v486
        %v522 = vpop.permute.xlu0 %521
        %v524 = vlaneseq
        %v525 = vshrl.u32 %v524, 7
        %v526 = vsub.s32 1, %v525
        %v527 = vrot.slane %v482, %v526
        %v528 = vlaneseq
        %v529 = vshrl.u32 %v528, 7
        %v530 = vsub.s32 1, %v529
        %v531 = vrot.slane %v483, %v530
        %v532 = vlaneseq
        %v533 = vshrl.u32 %v532, 7
        %v534 = vsub.s32 1, %v533
        %v535 = vrot.slane %v484, %v534
        %v536 = vlaneseq
        %v537 = vshrl.u32 %v536, 7
        %v538 = vsub.s32 1, %v537
        %v539 = vrot.slane %v485, %v538
        %v540 = vmul.f32 %v522, %v527
        %v541 = vmul.f32 %v522, %v531
        %v542 = vmul.f32 %v522, %v535
        %v543 = vmul.f32 %v522, %v539
        %v544 = vadd.f32 %v516, %v540
        %v545 = vadd.f32 %v517, %v541
        %v546 = vadd.f32 %v518, %v542
        %v547 = vadd.f32 %v519, %v543
        %548 = vset.pattern.permute.xlu0 2
        %549 = vperm.xlu0 %548, %v486
        %v550 = vpop.permute.xlu0 %549
        %v552 = vlaneseq
        %v553 = vshrl.u32 %v552, 7
        %v554 = vsub.s32 2, %v553
        %v555 = vrot.slane %v482, %v554
        %v556 = vlaneseq
        %v557 = vshrl.u32 %v556, 7
        %v558 = vsub.s32 2, %v557
        %v559 = vrot.slane %v483, %v558
        %v560 = vlaneseq
        %v561 = vshrl.u32 %v560, 7
        %v562 = vsub.s32 2, %v561
        %v563 = vrot.slane %v484, %v562
        %v564 = vlaneseq
        %v565 = vshrl.u32 %v564, 7
        %v566 = vsub.s32 2, %v565
        %v567 = vrot.slane %v485, %v566
        %v568 = vmul.f32 %v550, %v555
        %v569 = vmul.f32 %v550, %v559
        %v570 = vmul.f32 %v550, %v563
        %v571 = vmul.f32 %v550, %v567
        %v572 = vadd.f32 %v544, %v568
        %v573 = vadd.f32 %v545, %v569
        %v574 = vadd.f32 %v546, %v570
        %v575 = vadd.f32 %v547, %v571
        %576 = vset.pattern.permute.xlu0 3
        %577 = vperm.xlu0 %576, %v486
        %v578 = vpop.permute.xlu0 %577
        %v580 = vlaneseq
        %v581 = vshrl.u32 %v580, 7
        %v582 = vsub.s32 3, %v581
        %v583 = vrot.slane %v482, %v582
        %v584 = vlaneseq
        %v585 = vshrl.u32 %v584, 7
        %v586 = vsub.s32 3, %v585
        %v587 = vrot.slane %v483, %v586
        %v588 = vlaneseq
        %v589 = vshrl.u32 %v588, 7
        %v590 = vsub.s32 3, %v589
        %v591 = vrot.slane %v484, %v590
        %v592 = vlaneseq
        %v593 = vshrl.u32 %v592, 7
        %v594 = vsub.s32 3, %v593
        %v595 = vrot.slane %v485, %v594
        %v596 = vmul.f32 %v578, %v583
        %v597 = vmul.f32 %v578, %v587
        %v598 = vmul.f32 %v578, %v591
        %v599 = vmul.f32 %v578, %v595
        %v600 = vadd.f32 %v572, %v596
        %v601 = vadd.f32 %v573, %v597
        %v602 = vadd.f32 %v574, %v598
        %v603 = vadd.f32 %v575, %v599
        %v604 = vmax.f32 %v600, 0.0
        %v605 = vmax.f32 %v601, 0.0
        %v606 = vmax.f32 %v602, 0.0
        %v607 = vmax.f32 %v603, 0.0
        %v608 = vld [vmem:[%s4] sm:$0x1]
        %610 = vset.pattern.permute.xlu0 4
        %611 = vperm.xlu0 %610, %v608
        %v612 = vpop.permute.xlu0 %611
        %v614 = vlaneseq
        %v615 = vshrl.u32 %v614, 7
        %v616 = vsub.s32 0, %v615
        %v617 = vrot.slane %v612, %v616
        %618 = vset.pattern.permute.xlu0 0
        %619 = vperm.xlu0 %618, %v608
        %v620 = vpop.permute.xlu0 %619
        %v622 = vlaneseq
        %v623 = vshrl.u32 %v622, 7
        %v624 = vsub.s32 0, %v623
        %v625 = vrot.slane %v620, %v624
        %v626 = vmul.f32 %v625, %v604
        %v627 = vmul.f32 %v625, %v605
        %v628 = vmul.f32 %v625, %v606
        %v629 = vmul.f32 %v625, %v607
        %v630 = vadd.f32 %v617, %v626
        %v631 = vadd.f32 %v617, %v627
        %v632 = vadd.f32 %v617, %v628
        %v633 = vadd.f32 %v617, %v629
        %634 = vset.pattern.permute.xlu0 1
        %635 = vperm.xlu0 %634, %v608
        %v636 = vpop.permute.xlu0 %635
        %v638 = vlaneseq
        %v639 = vshrl.u32 %v638, 7
        %v640 = vsub.s32 0, %v639
        %v641 = vrot.slane %v636, %v640
        %v642 = vmul.f32 %v641, %v604
        %v643 = vmul.f32 %v641, %v605
        %v644 = vmul.f32 %v641, %v606
        %v645 = vmul.f32 %v641, %v607
        %v650 = vrot.slane %v642, 1
        %v651 = vrot.slane %v643, 1
        %v652 = vrot.slane %v644, 1
        %v653 = vrot.slane %v645, 1
        %v658 = vadd.f32 %v630, %v650
        %v659 = vadd.f32 %v631, %v651
        %v660 = vadd.f32 %v632, %v652
        %v661 = vadd.f32 %v633, %v653
        %662 = vset.pattern.permute.xlu0 2
        %663 = vperm.xlu0 %662, %v608
        %v664 = vpop.permute.xlu0 %663
        %v666 = vlaneseq
        %v667 = vshrl.u32 %v666, 7
        %v668 = vsub.s32 0, %v667
        %v669 = vrot.slane %v664, %v668
        %v670 = vmul.f32 %v669, %v604
        %v671 = vmul.f32 %v669, %v605
        %v672 = vmul.f32 %v669, %v606
        %v673 = vmul.f32 %v669, %v607
        %v678 = vrot.slane %v670, 2
        %v679 = vrot.slane %v671, 2
        %v680 = vrot.slane %v672, 2
        %v681 = vrot.slane %v673, 2
        %v686 = vadd.f32 %v658, %v678
        %v687 = vadd.f32 %v659, %v679
        %v688 = vadd.f32 %v660, %v680
        %v689 = vadd.f32 %v661, %v681
        %690 = vset.pattern.permute.xlu0 3
        %691 = vperm.xlu0 %690, %v608
        %v692 = vpop.permute.xlu0 %691
        %v694 = vlaneseq
        %v695 = vshrl.u32 %v694, 7
        %v696 = vsub.s32 0, %v695
        %v697 = vrot.slane %v692, %v696
        %v698 = vmul.f32 %v697, %v604
        %v699 = vmul.f32 %v697, %v605
        %v700 = vmul.f32 %v697, %v606
        %v701 = vmul.f32 %v697, %v607
        %v706 = vrot.slane %v698, 3
        %v707 = vrot.slane %v699, 3
        %v708 = vrot.slane %v700, 3
        %v709 = vrot.slane %v701, 3
        %v714 = vadd.f32 %v686, %v706
        %v715 = vadd.f32 %v687, %v707
        %v716 = vadd.f32 %v688, %v708
        %v717 = vadd.f32 %v689, %v709
        %v722 = vcombine.low %v714, %v715
        %v723 = vcombine.low %v716, %v717
        %v725 = vunpack.c.l.s4 1966171168
        %v726 = vunpack.c.0.s8 %v725
        %v727 = vlaneseq
        %v728 = vshrl.u32 %v727, 7
        %v729 = vsub.s32 %v726, %v728
        %v730 = vrot.slane %v722, %v729
        %v732 = vunpack.c.l.s4 1966171168
        %v733 = vunpack.c.0.s8 %v732
        %v734 = vlaneseq
        %v735 = vshrl.u32 %v734, 7
        %v736 = vsub.s32 %v733, %v735
        %v737 = vrot.slane %v723, %v736
        %v738 = vcombine.low %v730, %v737
        %v740 = vunpack.c.l.s4 1966171168
        %v741 = vunpack.c.0.s8 %v740
        %v742 = vlaneseq
        %v743 = vshrl.u32 %v742, 7
        %v744 = vsub.s32 %v741, %v743
        %v745 = vrot.slane %v738, %v744
        %v747 = vlaneseq
        %vm748 = vcmp.ge.s32.totalorder %v747, 0
        %vm749 = vcmp.lt.s32.totalorder %v747, 512
        %vm750 = vmand %vm748, %vm749
        %751 = vst.msk [vmem:[%s253] sm:$0xf] %vm750, %v745
        %s752 = sand.u32 %s141, 1
        %s753 = scalar_lea.sflag [#allocation4], %s752
        %s754 = sand.u32 %s141, 1
        %s755 = smul.addr %s754, 4
        %s756 = scalar_lea.vmem [#allocation7], %s755
        // Predicated region
        $region49: #{tpu_custom_call.1} parent=39 // pred_check
          %p757 = pneg %p151
        $region50: #{tpu_custom_call.1} parent=39 // pred_check_branch
          %759 = sbr.rel (%p757) target = $region52
        $region51: #{tpu_custom_call.1} parent=39 // pred_region
          %s760 = smul.u32 4, %s23
          %s762 = ssub.s32 64, 64
          %763 = vsyncadd %s753, %s762
          %s764 = smul.addr %s760, 16
          %s765 = scalar_lea.hbm %s5, %s764
          %s767 = sshll.u32 %s756, 4
          %s768 = int_to_ptr.vmem [resolvable:$true] %s767
          %770 = dma.vmem_to_hbm [thread:$0]  %s768, 64, %s765, %s753
        $region52: #{tpu_custom_call.1} parent=39 // pred_fallthru
          _
      $region40: #{tpu_custom_call.1} parent=5 // pred_fallthru
        _
      %p771 = scmp.le.s32.totalorder 2, %s18
      // Predicated region
      $region53: #{tpu_custom_call.1} parent=5 // pred_check
        %p772 = pneg %p771
      $region54: #{tpu_custom_call.1} parent=5 // pred_check_branch
        %774 = sbr.rel (%p772) target = $region56
      $region55: #{tpu_custom_call.1} parent=5 // pred_region
        %s775 = ssub.s32 %s18, 2
        // Predicated region
        $region57: #{tpu_custom_call.1} parent=55 // pred_check
          %p776 = pneg %p157
        $region58: #{tpu_custom_call.1} parent=55 // pred_check_branch
          %778 = sbr.rel (%p776) target = $region60
        $region59: #{tpu_custom_call.1} parent=55 // pred_region
          %s779 = sand.u32 %s142, 1
          %s780 = scalar_lea.sflag [#allocation4], %s779
          %s781 = sand.u32 %s142, 1
          %s782 = smul.addr %s781, 4
          %s783 = scalar_lea.vmem [#allocation7], %s782
          %784 = dma.done %s780, 64
        $region60: #{tpu_custom_call.1} parent=55 // pred_fallthru
          _
      $region56: #{tpu_custom_call.1} parent=5 // pred_fallthru
        _
    $region6: #{tpu_custom_call.1} parent=1 // loop_footer
      %s22 = sadd.s32 1, %s18
    $region7: #{tpu_custom_call.1} parent=1 // loop_footer_branch
      %17 = sbr.rel target = $region3
    $region8: #{tpu_custom_call.1} parent=1 // loop_exit
      _
    %785 = vsyncpa [#allocation3], 1
    %s786 = scalar_lea.sflag [#allocation3], 1
    %787 = vsyncpa %s786, 1
    %788 = vsyncpa [#allocation6], 1
    %789 = vsyncpa [#allocation4], 1
    %s790 = scalar_lea.sflag [#allocation4], 1
    %791 = vsyncpa %s790, 1

</llo_original>
